<compile_context>
chip_gen: v5e
topology: v5e:2x2
jax: 0.10.0
libtpu: 0.0.40
codegen_flags: <defaults>
</compile_context>

<pallas_src>
import jax
import jax.numpy as jnp
from jax.experimental import pallas as pl
from jax.experimental.pallas import tpu as pltpu  # noqa: F401  (kept for TPU-backend parity)


def _identity_alias_kernel(x_ref, o_ref):
    # Zero-traffic identity: the output HBM buffer is aliased to the input
    # (input_output_aliases={0: 0}), so there is nothing to move. The body is
    # intentionally empty -- no VMEM staging, no vector loads/stores, no DMA.
    del x_ref, o_ref


def identical_forward(x):
    """Identity forward pass (PyTorch `Identical.forward`): return x unchanged.

    An identity op has zero semantic cost, so the fast path is a pure
    passthrough: no kernel launch, no HBM traffic. This is what production
    code should use.
    """
    return x


def identical_forward_pallas(x):
    """Identity via an explicit (but zero-traffic) Pallas call.

    Emits a pallas_call whose input and output live in their original memory
    space (pl.ANY -> HBM) with the output aliased to the input. The kernel
    body does nothing, so there is no HBM<->VMEM round trip, no grid, and no
    padding/reshaping in the wrapper; the custom call is metadata-only on
    v5e / v6e / v7x regardless of input shape or dtype.
    """
    return pl.pallas_call(
        _identity_alias_kernel,
        out_shape=jax.ShapeDtypeStruct(x.shape, x.dtype),
        in_specs=[pl.BlockSpec(memory_space=pl.ANY)],
        out_specs=pl.BlockSpec(memory_space=pl.ANY),
        input_output_aliases={0: 0},   # output HBM buffer aliases the input
        cost_estimate=pl.CostEstimate(flops=0, transcendentals=0,
                                      bytes_accessed=0),
    )(x)


if __name__ == "__main__":
    key = jax.random.PRNGKey(0)

    # Primary case (matches the PyTorch module's NCHW-style usage).
    x = jax.random.normal(key, (2, 4, 16, 16), dtype=jnp.float32)

    # Fast path: pure passthrough (the recommended production path).
    y = jax.block_until_ready(identical_forward(x))
    assert y.shape == x.shape, (y.shape, x.shape)
    assert y.dtype == x.dtype, (y.dtype, x.dtype)
    assert bool(jnp.all(y == x)), "identity fast path mismatch"

    # Pallas path: zero-traffic alias kernel.
    y2 = jax.block_until_ready(identical_forward_pallas(x))
    assert y2.shape == x.shape and y2.dtype == x.dtype
    assert bool(jnp.all(y2 == x)), "identity alias kernel mismatch"

    # Odd-sized input: no padding, reshape, or slicing needed anywhere.
    x3 = jax.random.normal(jax.random.PRNGKey(0), (4, 3, 33, 17), dtype=jnp.float32)
    y3 = jax.block_until_ready(identical_forward_pallas(x3))
    assert y3.shape == x3.shape and y3.dtype == x3.dtype
    assert bool(jnp.all(y3 == x3)), "identity alias kernel mismatch (odd shape)"

    print("KERNEL_OK")
</pallas_src>

<mosaic_0001>
module attributes {stable_mosaic.version = 11 : i64} {
  func.func @_identity_alias_kernel(%arg0: memref<2x4x16x16xf32, #tpu.memory_space<any>>, %arg1: memref<2x4x16x16xf32, #tpu.memory_space<any>>) attributes {dimension_semantics = [], scalar_prefetch = 0 : i64, scratch_operands = 0 : i64, tpu.core_type = #tpu.core_type<tc>} {
    return
  }
}

</mosaic_0001>

<llo_original>
// kernel: tpu_custom_call.1
$region0: #{tpu_custom_call.1}
  #allocation0 [shape = 'u32[]', space=smem, size = 0x4, offset = 0x4, fixed_abs, tag = 'smem constant byte address 0x4 - core index']
  #allocation1 [shape = 'u32[72,128]{1,0:T(1,128)}', space=vmem, size = 0x9000, scoped, tag = 'internal scratch']
  %s0 = inlined_call_operand.hbm [shape: f32[2,4,16,16], index: 0, kind: input, shape index: {}, may-alias: {0,1}]
  %s1 = inlined_call_operand.hbm [shape: f32[2,4,16,16], index: 1, kind: output, shape index: {}, may-alias: {0,1}]
  %s2 = sld [smem:[#allocation0]]
  $region2: #{tpu_custom_call.1} parent=0
    _
  %s4 = ssub.s32 1, %s2
  %s5 = scalar_select 0, %s4, %s2

</llo_original>
